<compile_context>
chip_gen: v7x
topology: tpu7x:2x2x1
jax: 0.10.0
libtpu: 0.0.40
codegen_flags: <defaults>
</compile_context>

<pallas_src>
import functools

import jax
import jax.numpy as jnp
from jax.experimental import pallas as pl
from jax.experimental.pallas import tpu as pltpu


# ~4 MiB per input tile: big enough to amortize per-grid-step overhead even at
# v7x HBM bandwidth (3.2 TB/s), small enough that the double-buffered in+out
# footprint (~16 MiB) fits every generation once vmem_limit_bytes is raised.
_TILE_BYTE_BUDGET = 4 * 1024 * 1024
# in (4 MiB) + out (4 MiB), double-buffered (x2) = 16 MiB, plus params/headroom.
# Safe on v5e/v6e (128 MiB physical VMEM) and v7x (64 MiB physical per TC).
_VMEM_LIMIT_BYTES = 32 * 1024 * 1024


def _round_up(x, m):
    return ((x + m - 1) // m) * m


# -----------------------------------------------------------------------------
# channels_last: x viewed as (N, C); normalize each row over C (lane axis).
# -----------------------------------------------------------------------------
def _ln_rows_kernel(x_ref, w_ref, b_ref, o_ref, *, eps):
    x = x_ref[...].astype(jnp.float32)                  # (tm, C)
    mean = jnp.mean(x, axis=-1, keepdims=True)
    xc = x - mean
    var = jnp.mean(xc * xc, axis=-1, keepdims=True)     # biased variance (torch)
    inv = jax.lax.rsqrt(var + eps)
    w = w_ref[...].astype(jnp.float32)                  # (1, C)
    b = b_ref[...].astype(jnp.float32)
    o_ref[...] = (xc * inv * w + b).astype(o_ref.dtype)


def _pick_row_tile(N, C, itemsize):
    """Purely bytes-driven row tile: multiple of 8, or the full dim."""
    tm = _TILE_BYTE_BUDGET // max(1, C * itemsize)
    tm = max(8, (tm // 8) * 8)
    if tm < N:
        return tm
    # Whole array fits in one tile: split into >= 2 blocks when legal so a
    # 'parallel' grid axis feeds both v7x TensorCores (no-op on v5e/v6e).
    if N >= 16:
        return _round_up(pl.cdiv(N, 2), 8)
    return N                                             # block == full dim


def _layer_norm_channels_last(x2d, weight, bias, eps):
    N, C = x2d.shape
    itemsize = jnp.dtype(x2d.dtype).itemsize
    tm = _pick_row_tile(N, C, itemsize)
    w2d = weight.reshape(1, C)
    b2d = bias.reshape(1, C)
    cost = pl.CostEstimate(flops=7 * N * C, transcendentals=N,
                           bytes_accessed=2 * N * C * itemsize)
    return pl.pallas_call(
        functools.partial(_ln_rows_kernel, eps=eps),
        out_shape=jax.ShapeDtypeStruct((N, C), x2d.dtype),
        grid=(pl.cdiv(N, tm),),
        in_specs=[
            pl.BlockSpec((tm, C), lambda i: (i, 0)),
            pl.BlockSpec((1, C), lambda i: (0, 0)),      # params stay VMEM-resident
            pl.BlockSpec((1, C), lambda i: (0, 0)),
        ],
        out_specs=pl.BlockSpec((tm, C), lambda i: (i, 0)),
        compiler_params=pltpu.CompilerParams(
            dimension_semantics=("parallel",),
            vmem_limit_bytes=_VMEM_LIMIT_BYTES),
        cost_estimate=cost,
    )(x2d, w2d, b2d)


# -----------------------------------------------------------------------------
# channels_first: x viewed as (B, C, H*W); H*W on lanes, reduce over C
# (sublane axis -> XLU, a free slot here).  No NCHW<->NHWC transposes.
# -----------------------------------------------------------------------------
def _ln_cf_kernel(x_ref, w_ref, b_ref, o_ref, *, eps):
    x = x_ref[...].astype(jnp.float32)                  # (tb, C, tl)
    mean = jnp.mean(x, axis=1, keepdims=True)           # (tb, 1, tl)
    xc = x - mean
    var = jnp.mean(xc * xc, axis=1, keepdims=True)      # biased variance (torch)
    inv = jax.lax.rsqrt(var + eps)
    w = w_ref[...].astype(jnp.float32)                  # (1, C, 1) broadcasts over tb
    b = b_ref[...].astype(jnp.float32)
    o_ref[...] = (xc * inv * w + b).astype(o_ref.dtype)


def _pick_lane_tile(HW, C, itemsize, ensure_two_steps):
    """Purely bytes-driven lane tile: multiple of 128, or the full dim."""
    tl = _TILE_BYTE_BUDGET // max(1, C * itemsize)
    if tl >= HW:
        if ensure_two_steps and HW >= 256:
            return _round_up(pl.cdiv(HW, 2), 128)        # >= 2 grid steps (v7x)
        return HW                                        # block == full dim
    tl = max(128, (tl // 128) * 128)
    # Prefer >= 512-element contiguous runs per channel (strided-DMA efficiency
    # at v6e/v7x bandwidth) as long as it stays within ~2x the byte budget.
    if tl < 512 and 512 * C * itemsize <= 2 * _TILE_BYTE_BUDGET:
        tl = max(tl, min(512, (HW // 128) * 128))
    return max(tl, 128)


def _layer_norm_channels_first(x3d, weight, bias, eps):
    B, C, HW = x3d.shape
    itemsize = jnp.dtype(x3d.dtype).itemsize
    w3d = weight.reshape(1, C, 1)
    b3d = bias.reshape(1, C, 1)
    cost = pl.CostEstimate(flops=7 * B * C * HW, transcendentals=B * HW,
                           bytes_accessed=2 * B * C * HW * itemsize)
    plane_bytes = C * HW * itemsize

    if B > 1 and plane_bytes <= _TILE_BYTE_BUDGET:
        # Block over batch: (tb, C, HW) tiles restore ~budget-sized DMAs even
        # when a single (C, HW) plane is small (late ConvNeXt stages).
        tb = min(B, max(1, _TILE_BYTE_BUDGET // plane_bytes))
        if tb >= B:
            tb = pl.cdiv(B, 2)                           # >= 2 grid steps (v7x)
        grid = (pl.cdiv(B, tb),)
        in_specs = [
            pl.BlockSpec((tb, C, HW), lambda i: (i, 0, 0)),
            pl.BlockSpec((1, C, 1), lambda i: (0, 0, 0)),
            pl.BlockSpec((1, C, 1), lambda i: (0, 0, 0)),
        ]
        out_spec = pl.BlockSpec((tb, C, HW), lambda i: (i, 0, 0))
        dims = ("parallel",)
    else:
        # Plane too big for one tile (or B == 1): tile the H*W (lane) axis.
        tl = _pick_lane_tile(HW, C, itemsize, ensure_two_steps=(B == 1))
        grid = (B, pl.cdiv(HW, tl))
        in_specs = [
            pl.BlockSpec((1, C, tl), lambda b, j: (b, 0, j)),
            pl.BlockSpec((1, C, 1), lambda b, j: (0, 0, 0)),
            pl.BlockSpec((1, C, 1), lambda b, j: (0, 0, 0)),
        ]
        out_spec = pl.BlockSpec((1, C, tl), lambda b, j: (b, 0, j))
        dims = ("parallel", "parallel")

    return pl.pallas_call(
        functools.partial(_ln_cf_kernel, eps=eps),
        out_shape=jax.ShapeDtypeStruct((B, C, HW), x3d.dtype),
        grid=grid,
        in_specs=in_specs,
        out_specs=out_spec,
        compiler_params=pltpu.CompilerParams(
            dimension_semantics=dims,
            vmem_limit_bytes=_VMEM_LIMIT_BYTES),
        cost_estimate=cost,
    )(x3d, w3d, b3d)


# -----------------------------------------------------------------------------
# Module wrapper (mirrors the PyTorch ConvNeXt LayerNorm)
# -----------------------------------------------------------------------------
class PallasLayerNorm:
    def __init__(self, normalized_shape, eps=1e-6, data_format="channels_last"):
        if data_format not in ("channels_last", "channels_first"):
            raise NotImplementedError
        self.weight = jnp.ones((normalized_shape,), dtype=jnp.float32)
        self.bias = jnp.zeros((normalized_shape,), dtype=jnp.float32)
        self.eps = eps
        self.data_format = data_format
        self.normalized_shape = (normalized_shape,)

    def __call__(self, x):
        C = self.normalized_shape[0]
        if self.data_format == "channels_last":
            # x: (..., C) -> (N, C) view (free reshape, no transpose)
            assert x.shape[-1] == C
            lead = x.shape[:-1]
            y2d = _layer_norm_channels_last(
                x.reshape(-1, C), self.weight, self.bias, self.eps)
            return y2d.reshape(*lead, C)
        else:
            # channels_first: x is NCHW -> (B, C, H*W) view (free reshape)
            B, Cx, H, W = x.shape
            assert Cx == C
            y3d = _layer_norm_channels_first(
                x.reshape(B, C, H * W), self.weight, self.bias, self.eps)
            return y3d.reshape(B, C, H, W)


def _ref_layer_norm(x, weight, bias, eps, data_format):
    """Pure-JAX reference matching the PyTorch forward."""
    if data_format == "channels_last":
        u = jnp.mean(x, axis=-1, keepdims=True)
        s = jnp.mean((x - u) ** 2, axis=-1, keepdims=True)
        xn = (x - u) / jnp.sqrt(s + eps)
        return xn * weight + bias
    else:
        u = jnp.mean(x, axis=1, keepdims=True)
        s = jnp.mean((x - u) ** 2, axis=1, keepdims=True)
        xn = (x - u) / jnp.sqrt(s + eps)
        return weight[None, :, None, None] * xn + bias[None, :, None, None]


if __name__ == "__main__":
    key = jax.random.PRNGKey(0)
    k1, k2, k3, k4 = jax.random.split(key, 4)

    C = 4
    weight = 1.0 + 0.1 * jnp.arange(C, dtype=jnp.float32)
    bias = 0.05 * jnp.arange(C, dtype=jnp.float32)

    # ---- channels_first: NCHW (2, 4, 16, 16) -> batch-blocked path ----
    ln_cf = PallasLayerNorm(C, eps=1e-6, data_format="channels_first")
    ln_cf.weight, ln_cf.bias = weight, bias
    x_cf = jax.random.normal(k1, (2, C, 16, 16), dtype=jnp.float32)
    y_cf = jax.block_until_ready(ln_cf(x_cf))
    y_cf_ref = _ref_layer_norm(x_cf, weight, bias, 1e-6, "channels_first")
    assert y_cf.shape == x_cf.shape
    assert jnp.allclose(y_cf, y_cf_ref, atol=1e-5, rtol=1e-5)

    # ---- channels_first: NCHW (1, 4, 16, 16) -> lane-tiled path (B == 1) ----
    x_cf1 = jax.random.normal(k2, (1, C, 16, 16), dtype=jnp.float32)
    y_cf1 = jax.block_until_ready(ln_cf(x_cf1))
    y_cf1_ref = _ref_layer_norm(x_cf1, weight, bias, 1e-6, "channels_first")
    assert y_cf1.shape == x_cf1.shape
    assert jnp.allclose(y_cf1, y_cf1_ref, atol=1e-5, rtol=1e-5)

    # ---- channels_last: NHWC (2, 16, 16, 4) ----
    ln_cl = PallasLayerNorm(C, eps=1e-6, data_format="channels_last")
    ln_cl.weight, ln_cl.bias = weight, bias
    x_cl = jax.random.normal(k3, (2, 16, 16, C), dtype=jnp.float32)
    y_cl = jax.block_until_ready(ln_cl(x_cl))
    y_cl_ref = _ref_layer_norm(x_cl, weight, bias, 1e-6, "channels_last")
    assert y_cl.shape == x_cl.shape
    assert jnp.allclose(y_cl, y_cl_ref, atol=1e-5, rtol=1e-5)

    # ---- channels_last: ragged row count (3*5*5 = 75 rows -> masked tail) ----
    x_rag = jax.random.normal(k4, (3, 5, 5, C), dtype=jnp.float32)
    y_rag = jax.block_until_ready(ln_cl(x_rag))
    y_rag_ref = _ref_layer_norm(x_rag, weight, bias, 1e-6, "channels_last")
    assert y_rag.shape == x_rag.shape
    assert jnp.allclose(y_rag, y_rag_ref, atol=1e-5, rtol=1e-5)

    print("KERNEL_OK")
</pallas_src>

<mosaic_0001>
module attributes {stable_mosaic.version = 11 : i64} {
  func.func @_ln_cf_kernel(%arg0: i32, %arg1: memref<1x4x256xf32, #tpu.memory_space<vmem>>, %arg2: memref<1x4x1xf32, #tpu.memory_space<vmem>>, %arg3: memref<1x4x1xf32, #tpu.memory_space<vmem>>, %arg4: memref<1x4x256xf32, #tpu.memory_space<vmem>>) attributes {dimension_semantics = [#tpu.dimension_semantics<parallel>], iteration_bounds = array<i64: 2>, scalar_prefetch = 0 : i64, scratch_operands = 0 : i64, tpu.core_type = #tpu.core_type<tc>, window_params = [{transform_indices = @transform_0, window_bounds = array<i64: 1, 4, 256>}, {pipeline_mode = #tpu.pipeline_mode<synchronous>, transform_indices = @transform_1, window_bounds = array<i64: 1, 4, 1>}, {pipeline_mode = #tpu.pipeline_mode<synchronous>, transform_indices = @transform_2, window_bounds = array<i64: 1, 4, 1>}, {transform_indices = @transform_3, window_bounds = array<i64: 1, 4, 256>}]} {
    %c0 = arith.constant 0 : index
    %c0_0 = arith.constant 0 : index
    %c0_1 = arith.constant 0 : index
    %0 = vector.load %arg1[%c0, %c0_0, %c0_1] : memref<1x4x256xf32, #tpu.memory_space<vmem>>, vector<1x4x256xf32>
    %cst = arith.constant dense<0.000000e+00> : vector<1x256xf32>
    %1 = vector.multi_reduction <add>, %0, %cst [1] : vector<1x4x256xf32> to vector<1x256xf32>
    %2 = vector.shape_cast %1 : vector<1x256xf32> to vector<1x1x256xf32>
    %cst_2 = arith.constant 4.000000e+00 : f32
    %3 = vector.broadcast %cst_2 : f32 to vector<1x1x256xf32>
    %4 = arith.divf %2, %3 : vector<1x1x256xf32>
    %5 = vector.broadcast %4 : vector<1x1x256xf32> to vector<1x4x256xf32>
    %6 = arith.subf %0, %5 : vector<1x4x256xf32>
    %7 = arith.mulf %6, %6 : vector<1x4x256xf32>
    %cst_3 = arith.constant dense<0.000000e+00> : vector<1x256xf32>
    %8 = vector.multi_reduction <add>, %7, %cst_3 [1] : vector<1x4x256xf32> to vector<1x256xf32>
    %9 = vector.shape_cast %8 : vector<1x256xf32> to vector<1x1x256xf32>
    %cst_4 = arith.constant 4.000000e+00 : f32
    %10 = vector.broadcast %cst_4 : f32 to vector<1x1x256xf32>
    %11 = arith.divf %9, %10 : vector<1x1x256xf32>
    %cst_5 = arith.constant 9.99999997E-7 : f32
    %12 = vector.broadcast %cst_5 : f32 to vector<1x1x256xf32>
    %13 = arith.addf %11, %12 : vector<1x1x256xf32>
    %14 = math.rsqrt %13 : vector<1x1x256xf32>
    %c0_6 = arith.constant 0 : index
    %c0_7 = arith.constant 0 : index
    %c0_8 = arith.constant 0 : index
    %15 = vector.load %arg2[%c0_6, %c0_7, %c0_8] : memref<1x4x1xf32, #tpu.memory_space<vmem>>, vector<1x4x1xf32>
    %c0_9 = arith.constant 0 : index
    %c0_10 = arith.constant 0 : index
    %c0_11 = arith.constant 0 : index
    %16 = vector.load %arg3[%c0_9, %c0_10, %c0_11] : memref<1x4x1xf32, #tpu.memory_space<vmem>>, vector<1x4x1xf32>
    %17 = vector.broadcast %14 : vector<1x1x256xf32> to vector<1x4x256xf32>
    %18 = arith.mulf %6, %17 : vector<1x4x256xf32>
    %19 = vector.broadcast %15 : vector<1x4x1xf32> to vector<1x4x256xf32>
    %20 = arith.mulf %18, %19 : vector<1x4x256xf32>
    %21 = vector.broadcast %16 : vector<1x4x1xf32> to vector<1x4x256xf32>
    %22 = arith.addf %20, %21 : vector<1x4x256xf32>
    %c0_12 = arith.constant 0 : index
    %c0_13 = arith.constant 0 : index
    %c0_14 = arith.constant 0 : index
    %23 = vector.load %arg4[%c0_12, %c0_13, %c0_14] : memref<1x4x256xf32, #tpu.memory_space<vmem>>, vector<1x4x256xf32>
    tpu.vector_store %arg4[%c0_12, %c0_13, %c0_14], %22 {strides = array<i32>} : memref<1x4x256xf32, #tpu.memory_space<vmem>>, vector<1x4x256xf32>,
    return
  }
  func.func @transform_0(%arg0: i32) -> (i32, i32, i32) {
    %c0_i32 = arith.constant 0 : i32
    %c0_i32_0 = arith.constant 0 : i32
    %c0_i32_1 = arith.constant 0 : i32
    return %arg0, %c0_i32, %c0_i32_0 : i32, i32, i32
  }
  func.func @transform_1(%arg0: i32) -> (i32, i32, i32) {
    %c0_i32 = arith.constant 0 : i32
    %c0_i32_0 = arith.constant 0 : i32
    %c0_i32_1 = arith.constant 0 : i32
    %c0_i32_2 = arith.constant 0 : i32
    return %c0_i32, %c0_i32_0, %c0_i32_1 : i32, i32, i32
  }
  func.func @transform_2(%arg0: i32) -> (i32, i32, i32) {
    %c0_i32 = arith.constant 0 : i32
    %c0_i32_0 = arith.constant 0 : i32
    %c0_i32_1 = arith.constant 0 : i32
    %c0_i32_2 = arith.constant 0 : i32
    return %c0_i32, %c0_i32_0, %c0_i32_1 : i32, i32, i32
  }
  func.func @transform_3(%arg0: i32) -> (i32, i32, i32) {
    %c0_i32 = arith.constant 0 : i32
    %c0_i32_0 = arith.constant 0 : i32
    %c0_i32_1 = arith.constant 0 : i32
    return %arg0, %c0_i32, %c0_i32_0 : i32, i32, i32
  }
}

</mosaic_0001>

<llo_original>
// kernel: tpu_custom_call.1
$region0: #{tpu_custom_call.1}
  #allocation0 [shape = 'u32[]', space=smem, size = 0x4, offset = 0x4, fixed_abs, tag = 'smem constant byte address 0x4 - core index']
  #allocation1 [shape = 'u32[144,128]{1,0:T(1,128)}', space=vmem, size = 0x12000, scoped, tag = 'internal scratch']
  %s0 = inlined_call_operand.hbm [shape: f32[2,4,256], index: 0, kind: input, shape index: {}]
  %s1 = inlined_call_operand.vmem [shape: f32[1,4,1], index: 1, kind: input, shape index: {}]
  %s2 = inlined_call_operand.vmem [shape: f32[1,4,1], index: 2, kind: input, shape index: {}]
  %s3 = inlined_call_operand.hbm [shape: f32[2,4,256], index: 3, kind: output, shape index: {}]
  %s4 = sld [smem:[#allocation0]]
  $region49: #{tpu_custom_call.1} parent=0
    _
  %s6 = ssub.s32 1, %s4
  %s7 = scalar_select 0, %s6, %s4
  $region1: #{tpu_custom_call.1} parent=0
    #allocation2 [shape = 'u8[8192]{0}', space=vmem, size = 0x2000, scoped, tag = 'input window, operand 0']
    #allocation3 [shape = 's32[2]{0}', space=sflag, size = 0x8, scoped, tag = 'scoped memory for tpu_custom_call.1']
    #allocation4 [shape = 's32[2]{0}', space=sflag, size = 0x8, scoped, tag = 'scoped memory for tpu_custom_call.1']
    #allocation5 [shape = 'u8[8192]{0}', space=vmem, size = 0x2000, scoped, tag = 'output window, operand 0']
    %8 = vsyncpa [#allocation3], 0
    %s9 = scalar_lea.sflag [#allocation3], 1
    %10 = vsyncpa %s9, 0
    %11 = vsyncpa [#allocation4], 0
    %s12 = scalar_lea.sflag [#allocation4], 1
    %13 = vsyncpa %s12, 0
    loop: start=0, step=1, limit=4
    $region2: #{tpu_custom_call.1} parent=1 // loop_pre_header
      _
    $region3: #{tpu_custom_call.1} parent=1 // loop_header
      %s15 = sphi 0, %s19
      %p16 = scmp.ge.s32.totalorder %s15, 4
      %s25 = sphi 0, %s27
      %s28 = sphi 0, %s25
      %s29 = sphi 0, %s28
      %s45 = sphi 0, %s29
      %s49 = sphi 0, %s49
      %s51 = sphi 0, %s49
      %s52 = sphi 0, %s51
      %s66 = sphi 0, %s52
      %s70 = sphi 0, %s70
      %s72 = sphi 0, %s70
      %s73 = sphi 0, %s72
      %s87 = sphi 0, %s73
      %s93 = sphi 0, %s95
      %s96 = sphi 0, %s93
      %s97 = sphi 0, %s96
      %s113 = sphi 0, %s97
    $region4: #{tpu_custom_call.1} parent=1 // loop_header_branch
      %18 = sbr.rel (%p16) target = $region8
    $region5: #{tpu_custom_call.1} parent=1 // loop_body
      %s20 = ssub.s32 %s15, 1
      %s21 = ssub.s32 %s15, 2
      %s22 = sadd.s32 %s15, 1
      %s23 = ssub.s32 %s15, %s22
      %p24 = scmp.eq.s32.totalorder %s23, 0
      %s26 = sadd.s32 %s25, 1
      %s27 = scalar_select %p24, %s25, %s26
      %p30 = pneg %p24
      %p31 = scmp.eq.s32.totalorder %s15, 1
      %p32 = por %p30, %p31
      %p33 = scmp.ne.s32.totalorder %s25, %s28
      %p34 = scmp.eq.s32.totalorder %s15, 0
      %p35 = por %p33, %p34
      %p36 = scmp.ne.s32.totalorder %s25, %s28
      %p37 = scmp.eq.s32.totalorder %s20, 1
      %p38 = por %p36, %p37
      %p39 = scmp.ne.s32.totalorder %s28, %s29
      %p40 = scmp.eq.s32.totalorder %s20, 0
      %p41 = por %p39, %p40
      %p42 = scmp.ne.s32.totalorder %s28, %s29
      %p43 = scmp.eq.s32.totalorder %s21, 1
      %p44 = por %p42, %p43
      %p46 = scmp.ne.s32.totalorder %s29, %s45
      %p47 = scmp.eq.s32.totalorder %s21, 0
      %p48 = por %p46, %p47
      %s50 = sadd.s32 %s49, 1
      %p53 = scmp.eq.s32.totalorder %s15, 1
      %p54 = scmp.ne.s32.totalorder %s49, %s51
      %p55 = scmp.eq.s32.totalorder %s15, 0
      %p56 = por %p54, %p55
      %p57 = scmp.ne.s32.totalorder %s49, %s51
      %p58 = scmp.eq.s32.totalorder %s20, 1
      %p59 = por %p57, %p58
      %p60 = scmp.ne.s32.totalorder %s51, %s52
      %p61 = scmp.eq.s32.totalorder %s20, 0
      %p62 = por %p60, %p61
      %p63 = scmp.ne.s32.totalorder %s51, %s52
      %p64 = scmp.eq.s32.totalorder %s21, 1
      %p65 = por %p63, %p64
      %p67 = scmp.ne.s32.totalorder %s52, %s66
      %p68 = scmp.eq.s32.totalorder %s21, 0
      %p69 = por %p67, %p68
      %s71 = sadd.s32 %s70, 1
      %p74 = scmp.eq.s32.totalorder %s15, 1
      %p75 = scmp.ne.s32.totalorder %s70, %s72
      %p76 = scmp.eq.s32.totalorder %s15, 0
      %p77 = por %p75, %p76
      %p78 = scmp.ne.s32.totalorder %s70, %s72
      %p79 = scmp.eq.s32.totalorder %s20, 1
      %p80 = por %p78, %p79
      %p81 = scmp.ne.s32.totalorder %s72, %s73
      %p82 = scmp.eq.s32.totalorder %s20, 0
      %p83 = por %p81, %p82
      %p84 = scmp.ne.s32.totalorder %s72, %s73
      %p85 = scmp.eq.s32.totalorder %s21, 1
      %p86 = por %p84, %p85
      %p88 = scmp.ne.s32.totalorder %s73, %s87
      %p89 = scmp.eq.s32.totalorder %s21, 0
      %p90 = por %p88, %p89
      %s91 = ssub.s32 %s15, %s22
      %p92 = scmp.eq.s32.totalorder %s91, 0
      %s94 = sadd.s32 %s93, 1
      %s95 = scalar_select %p92, %s93, %s94
      %p98 = pneg %p92
      %p99 = scmp.eq.s32.totalorder %s15, 1
      %p100 = por %p98, %p99
      %p101 = scmp.ne.s32.totalorder %s93, %s96
      %p102 = scmp.eq.s32.totalorder %s15, 0
      %p103 = por %p101, %p102
      %p104 = scmp.ne.s32.totalorder %s93, %s96
      %p105 = scmp.eq.s32.totalorder %s20, 1
      %p106 = por %p104, %p105
      %p107 = scmp.ne.s32.totalorder %s96, %s97
      %p108 = scmp.eq.s32.totalorder %s20, 0
      %p109 = por %p107, %p108
      %p110 = scmp.ne.s32.totalorder %s96, %s97
      %p111 = scmp.eq.s32.totalorder %s21, 1
      %p112 = por %p110, %p111
      %p114 = scmp.ne.s32.totalorder %s97, %s113
      %p115 = scmp.eq.s32.totalorder %s21, 0
      %p116 = por %p114, %p115
      %p117 = scmp.le.s32.totalorder 1, %s15
      %p118 = scmp.lt.s32.totalorder %s15, 3
      %p119 = pnand %p117, %p118
      %p120 = pneg %p119
      // Predicated region
      $region9: #{tpu_custom_call.1} parent=5 // pred_check
        _
      $region10: #{tpu_custom_call.1} parent=5 // pred_check_branch
        %122 = sbr.rel (%p119) target = $region12
      $region11: #{tpu_custom_call.1} parent=5 // pred_region
        %s123 = ssub.s32 %s15, 1
        // Predicated region
        $region13: #{tpu_custom_call.1} parent=11 // pred_check
          %p124 = pneg %p62
        $region14: #{tpu_custom_call.1} parent=11 // pred_check_branch
          %126 = sbr.rel (%p124) target = $region16
        $region15: #{tpu_custom_call.1} parent=11 // pred_region
          _
        $region16: #{tpu_custom_call.1} parent=11 // pred_fallthru
          _
        // Predicated region
        $region17: #{tpu_custom_call.1} parent=11 // pred_check
          %p127 = pneg %p83
        $region18: #{tpu_custom_call.1} parent=11 // pred_check_branch
          %129 = sbr.rel (%p127) target = $region20
        $region19: #{tpu_custom_call.1} parent=11 // pred_region
          _
        $region20: #{tpu_custom_call.1} parent=11 // pred_fallthru
          _
      $region12: #{tpu_custom_call.1} parent=5 // pred_fallthru
        _
      %p130 = scmp.lt.s32.totalorder %s15, 2
      // Predicated region
      $region21: #{tpu_custom_call.1} parent=5 // pred_check
        %p131 = pneg %p130
      $region22: #{tpu_custom_call.1} parent=5 // pred_check_branch
        %133 = sbr.rel (%p131) target = $region24
      $region23: #{tpu_custom_call.1} parent=5 // pred_region
        // Predicated region
        $region25: #{tpu_custom_call.1} parent=23 // pred_check
          %p134 = pneg %p35
        $region26: #{tpu_custom_call.1} parent=23 // pred_check_branch
          %136 = sbr.rel (%p134) target = $region28
        $region27: #{tpu_custom_call.1} parent=23 // pred_region
          %s137 = sand.u32 %s25, 1
          %s138 = scalar_lea.sflag [#allocation3], %s137
          %s139 = sand.u32 %s25, 1
          %s140 = smul.addr %s139, 8
          %s141 = scalar_lea.vmem [#allocation2], %s140
          %s143 = ssub.s32 128, 128
          %144 = vsyncadd %s138, %s143
          %s145 = smul.addr %s15, 2
          %s146 = smul.addr %s145, 64
          %s147 = scalar_lea.hbm %s0, %s146
          %s149 = sshll.u32 %s141, 4
          %s150 = int_to_ptr.vmem [resolvable:$true] %s149
          %152 = dma.hbm_to_vmem [thread:$0]  %s147, 128, %s150, %s138
        $region28: #{tpu_custom_call.1} parent=23 // pred_fallthru
          _
      $region24: #{tpu_custom_call.1} parent=5 // pred_fallthru
        _
      %p153 = scmp.le.s32.totalorder 1, %s15
      %p154 = scmp.lt.s32.totalorder %s15, 3
      %p155 = pnand %p153, %p154
      %p156 = pneg %p155
      // Predicated region
      $region29: #{tpu_custom_call.1} parent=5 // pred_check
        _
      $region30: #{tpu_custom_call.1} parent=5 // pred_check_branch
        %158 = sbr.rel (%p155) target = $region32
      $region31: #{tpu_custom_call.1} parent=5 // pred_region
        %s159 = ssub.s32 %s15, 1
        %s160 = sand.u32 %s28, 1
        %s161 = scalar_lea.sflag [#allocation3], %s160
        %s162 = sand.u32 %s28, 1
        %s163 = smul.addr %s162, 8
        %s164 = scalar_lea.vmem [#allocation2], %s163
        // Predicated region
        $region33: #{tpu_custom_call.1} parent=31 // pred_check
          %p165 = pneg %p41
        $region34: #{tpu_custom_call.1} parent=31 // pred_check_branch
          %167 = sbr.rel (%p165) target = $region36
        $region35: #{tpu_custom_call.1} parent=31 // pred_region
          %168 = dma.done %s161, 128
        $region36: #{tpu_custom_call.1} parent=31 // pred_fallthru
          _
        %s169 = sand.u32 %s28, 1
        %s170 = scalar_lea.sflag [#allocation3], %s169
        %s171 = sand.u32 %s28, 1
        %s172 = smul.addr %s171, 8
        %s173 = scalar_lea.vmem [#allocation2], %s172
        %p174 = pneg %p41
        %p175 = pneg %p38
        %p176 = pneg %p62
        %p177 = pneg %p59
        %p178 = pneg %p83
        %p179 = pneg %p80
        %p180 = pneg %p109
        %p181 = pneg %p106
        %s182 = sand.u32 %s96, 1
        %s183 = scalar_lea.sflag [#allocation4], %s182
        %s184 = sand.u32 %s96, 1
        %s185 = smul.addr %s184, 8
        %s186 = scalar_lea.vmem [#allocation5], %s185
        %v187 = vld [vmem:[%s164] sm:$0xff]
        %v189 = vcombine.high %v187, %v187
        %vm191 = vcmask 1043456
        %v192 = vsel %vm191, %v187, 0.0
        %v193 = vrot.slane %v192, 4
        %v194 = vadd.f32 %v192, %v193
        %v195 = vrot.slane %v194, 2
        %v196 = vadd.f32 %v194, %v195
        %v197 = vrot.slane %v196, 1
        %v198 = vadd.f32 %v196, %v197
        %v199 = vsel %vm191, %v189, 0.0
        %v200 = vrot.slane %v199, 4
        %v201 = vadd.f32 %v199, %v200
        %v202 = vrot.slane %v201, 2
        %v203 = vadd.f32 %v201, %v202
        %v204 = vrot.slane %v203, 1
        %v205 = vadd.f32 %v203, %v204
        %v206 = vrcp.pop 4.0
        %v207 = vmul.f32 %v198, %v206
        %v208 = vmul.f32 %v205, %v206
        %v211 = vcombine.low %v207, %v208
        %v213 = vsub.f32 %v187, %v211
        %v214 = vmul.f32 %v213, %v213
        %v216 = vcombine.high %v214, %v214
        %v218 = vsel %vm191, %v214, 0.0
        %v219 = vrot.slane %v218, 4
        %v220 = vadd.f32 %v218, %v219
        %v221 = vrot.slane %v220, 2
        %v222 = vadd.f32 %v220, %v221
        %v223 = vrot.slane %v222, 1
        %v224 = vadd.f32 %v222, %v223
        %v225 = vsel %vm191, %v216, 0.0
        %v226 = vrot.slane %v225, 4
        %v227 = vadd.f32 %v225, %v226
        %v228 = vrot.slane %v227, 2
        %v229 = vadd.f32 %v227, %v228
        %v230 = vrot.slane %v229, 1
        %v231 = vadd.f32 %v229, %v230
        %v232 = vmul.f32 %v224, %v206
        %v233 = vmul.f32 %v231, %v206
        %v234 = vadd.f32 %v232, 1e-06
        %v235 = vadd.f32 %v233, 1e-06
        %v236 = vrsqrt.pop %v234
        %v237 = vrsqrt.pop %v235
        %v238 = vld [vmem:[%s1] sm:$0xf]
        %v239 = vld [vmem:[%s2] sm:$0xf]
        %v242 = vcombine.low %v236, %v237
        %v244 = vmul.f32 %v213, %v242
        %246 = vset.pattern.permute.xlu0 0
        %247 = vperm.xlu0 %246, %v238
        %v248 = vpop.permute.xlu0 %247
        %v250 = vunpack.c.l.s4 839922192
        %v251 = vunpack.c.0.s8 %v250
        %v252 = vlaneseq
        %v253 = vshrl.u32 %v252, 7
        %v254 = vsub.s32 %v251, %v253
        %v255 = vrot.slane %v248, %v254
        %v257 = vmul.f32 %v244, %v255
        %259 = vset.pattern.permute.xlu0 0
        %260 = vperm.xlu0 %259, %v239
        %v261 = vpop.permute.xlu0 %260
        %v263 = vunpack.c.l.s4 839922192
        %v264 = vunpack.c.0.s8 %v263
        %v265 = vlaneseq
        %v266 = vshrl.u32 %v265, 7
        %v267 = vsub.s32 %v264, %v266
        %v268 = vrot.slane %v261, %v267
        %v270 = vadd.f32 %v257, %v268
        %271 = vst [vmem:[%s186] sm:$0xff] %v270
        %s272 = sand.u32 %s96, 1
        %s273 = scalar_lea.sflag [#allocation4], %s272
        %s274 = sand.u32 %s96, 1
        %s275 = smul.addr %s274, 8
        %s276 = scalar_lea.vmem [#allocation5], %s275
        // Predicated region
        $region37: #{tpu_custom_call.1} parent=31 // pred_check
          %p277 = pneg %p106
        $region38: #{tpu_custom_call.1} parent=31 // pred_check_branch
          %279 = sbr.rel (%p277) target = $region40
        $region39: #{tpu_custom_call.1} parent=31 // pred_region
          %s281 = ssub.s32 128, 128
          %282 = vsyncadd %s273, %s281
          %s283 = smul.addr %s20, 2
          %s284 = smul.addr %s283, 64
          %s285 = scalar_lea.hbm %s3, %s284
          %s287 = sshll.u32 %s276, 4
          %s288 = int_to_ptr.vmem [resolvable:$true] %s287
          %290 = dma.vmem_to_hbm [thread:$0]  %s288, 128, %s285, %s273
        $region40: #{tpu_custom_call.1} parent=31 // pred_fallthru
          _
      $region32: #{tpu_custom_call.1} parent=5 // pred_fallthru
        _
      %p291 = scmp.le.s32.totalorder 2, %s15
      // Predicated region
      $region41: #{tpu_custom_call.1} parent=5 // pred_check
        %p292 = pneg %p291
      $region42: #{tpu_custom_call.1} parent=5 // pred_check_branch
        %294 = sbr.rel (%p292) target = $region44
      $region43: #{tpu_custom_call.1} parent=5 // pred_region
        %s295 = ssub.s32 %s15, 2
        // Predicated region
        $region45: #{tpu_custom_call.1} parent=43 // pred_check
          %p296 = pneg %p112
        $region46: #{tpu_custom_call.1} parent=43 // pred_check_branch
          %298 = sbr.rel (%p296) target = $region48
        $region47: #{tpu_custom_call.1} parent=43 // pred_region
          %s299 = sand.u32 %s97, 1
          %s300 = scalar_lea.sflag [#allocation4], %s299
          %s301 = sand.u32 %s97, 1
          %s302 = smul.addr %s301, 8
          %s303 = scalar_lea.vmem [#allocation5], %s302
          %304 = dma.done %s300, 128
        $region48: #{tpu_custom_call.1} parent=43 // pred_fallthru
          _
      $region44: #{tpu_custom_call.1} parent=5 // pred_fallthru
        _
    $region6: #{tpu_custom_call.1} parent=1 // loop_footer
      %s19 = sadd.s32 1, %s15
    $region7: #{tpu_custom_call.1} parent=1 // loop_footer_branch
      %14 = sbr.rel target = $region3
    $region8: #{tpu_custom_call.1} parent=1 // loop_exit
      _
    %305 = vsyncpa [#allocation3], 1
    %s306 = scalar_lea.sflag [#allocation3], 1
    %307 = vsyncpa %s306, 1
    %308 = vsyncpa [#allocation4], 1
    %s309 = scalar_lea.sflag [#allocation4], 1
    %310 = vsyncpa %s309, 1

</llo_original>
